<compile_context>
chip_gen: v5e
topology: v5e:2x2
jax: 0.10.0
libtpu: 0.0.40
codegen_flags: <defaults>
</compile_context>

<pallas_src>
import functools

import jax
import jax.numpy as jnp
from jax import lax
from jax.experimental import pallas as pl
from jax.experimental.pallas import tpu as pltpu


def _round_up(x, m):
    return (x + m - 1) // m * m


# --------------------------------- kernel -----------------------------------
def _res_layer_kernel(x_ref, m_ref, w1_ref, b1_ref, w2_ref, b2_ref, out_ref,
                      apad_ref, work_ref, *, ks, dil_h, dil_w, H, W, lpad, direct):
    """One batch element: x + LReLU(conv2(LReLU(conv1(x)+b1))+b2), all in VMEM.

    BN scale is pre-folded into the conv weights; b1/b2 are the folded BN biases.
    direct=True  : accumulate ks*ks K=C matmuls into the f32 accumulator work_ref.
    direct=False : build an im2col slab work_ref (ks*ks*C, HW), one K=9C matmul.
    """
    C = out_ref.shape[1]
    HW = H * W
    mdt = apad_ref.dtype                     # MXU operand dtype (bf16 or f32)
    center = ks // 2

    # Zero only the pad strips; the (C, HW) middle is fully overwritten by every
    # conv.  Not gated on program_id == 0: with a "parallel" grid axis a second
    # TensorCore's private scratch would otherwise never get initialised.
    rw = apad_ref.shape[1] - (lpad + HW)
    apad_ref[:, :lpad] = jnp.zeros((C, lpad), mdt)
    apad_ref[:, lpad + HW:] = jnp.zeros((C, rw), mdt)

    def taps():
        for t in range(ks * ks):
            i, j = divmod(t, ks)
            off = (i - center) * dil_h * W + (j - center) * dil_w
            # Out-of-image rows already read zeros from the pad strips; only
            # column wrap needs a mask, and only for off-centre columns.
            mrow = None if j == center else (j if j < center else j - 1)
            yield t, off, mrow

    def conv_bias_lrelu(w_ref_, b_ref_):
        if direct:
            for t, off, mrow in taps():
                piece = apad_ref[:, lpad + off:lpad + off + HW]      # (C, HW) mdt
                if mrow is not None:
                    piece = piece * m_ref[mrow:mrow + 1, :]
                contrib = jnp.dot(w_ref_[:, t * C:(t + 1) * C], piece,
                                  preferred_element_type=jnp.float32)
                if t == 0:
                    work_ref[...] = contrib
                else:
                    work_ref[...] += contrib
            acc = work_ref[...]                                      # (C, HW) f32
        else:
            for t, off, mrow in taps():
                piece = apad_ref[:, lpad + off:lpad + off + HW]
                if mrow is not None:
                    piece = piece * m_ref[mrow:mrow + 1, :]
                work_ref[t * C:(t + 1) * C, :] = piece
            acc = jnp.dot(w_ref_[...], work_ref[...],
                          preferred_element_type=jnp.float32)        # (C, HW) f32
        y = acc + b_ref_[...]                  # folded BatchNorm bias (eval mode)
        return jnp.maximum(y, 0.1 * y)         # LeakyReLU(negative_slope=0.1)

    apad_ref[:, lpad:lpad + HW] = x_ref[0].astype(mdt)
    h = conv_bias_lrelu(w1_ref, b1_ref)
    apad_ref[:, lpad:lpad + HW] = h.astype(mdt)    # intermediate never leaves VMEM
    h = conv_bias_lrelu(w2_ref, b2_ref)
    # Residual: re-read the VMEM-resident input block (no f32 copy kept live).
    out_ref[0] = (x_ref[0].astype(jnp.float32) + h).astype(out_ref.dtype)


# -------------------------------- wrapper ------------------------------------
def fold_bn(gamma, beta, running_mean, running_var, eps=1e-5):
    scale = gamma / jnp.sqrt(running_var + eps)
    bias = beta - running_mean * scale
    return scale.astype(jnp.float32)[:, None], bias.astype(jnp.float32)[:, None]


def conv_weight_to_matmul(w_oihw):
    """(Cout, Cin, kh, kw) -> (Cout, kh*kw*Cin), matching the kernel's tap order."""
    co, ci, kh, kw = w_oihw.shape
    return jnp.transpose(w_oihw, (0, 2, 3, 1)).reshape(co, kh * kw * ci)


def _col_masks(H, W, ks, dw):
    """(max(ks-1,1), H*W) column-validity mask for each off-centre column offset."""
    ww = jnp.arange(W)[None, :]
    rows = []
    for j in range(ks):
        if j == ks // 2:
            continue
        b = (j - ks // 2) * dw
        m = ((ww + b >= 0) & (ww + b < W)).astype(jnp.float32)
        rows.append(jnp.broadcast_to(m, (H, W)).reshape(H * W))
    if not rows:                              # ks == 1: no masks needed
        rows = [jnp.ones((H * W,), jnp.float32)]
    return jnp.stack(rows)


def res_layer_forward(x_nchw, params, *, ks=3, dilation=1,
                      use_bf16_matmul=True, direct_min_c=128):
    """ResLayer.forward: x + conv2(conv1(x)); BatchNorm in eval (inference) mode."""
    N, C, H, W = x_nchw.shape
    dh, dw = (dilation, dilation) if isinstance(dilation, int) else tuple(dilation)
    HW = H * W
    xdt = x_nchw.dtype
    mdt = jnp.bfloat16 if (use_bf16_matmul or xdt == jnp.bfloat16) else jnp.float32
    direct = C >= direct_min_c                      # direct 9-tap accumulation path

    pad = (ks // 2) * dh * W + (ks // 2) * dw       # max |flattened tap offset|
    lpad = max(_round_up(pad, 128), 128)            # lane-aligned left zero-pad
    apad_w = lpad + HW + pad

    masks = _col_masks(H, W, ks, dw).astype(mdt)
    s1, b1 = fold_bn(*params["bn1"])
    s2, b2 = fold_bn(*params["bn2"])
    # Fold BN scale into the conv weights (per-output-channel row scaling).
    w1 = (conv_weight_to_matmul(params["w1"]).astype(jnp.float32) * s1).astype(mdt)
    w2 = (conv_weight_to_matmul(params["w2"]).astype(jnp.float32) * s2).astype(mdt)

    x_flat = x_nchw.reshape(N, C, HW)               # free reshape, no transpose

    # Explicit VMEM budget (scratch + double-buffered blocks) with ~1.5x headroom.
    # TODO(synk): on v7x (64 MiB physical VMEM) cap this at ~56 MiB and add the
    # spatial grid axis with a row halo so per-step blocks fit and both TCs work.
    bm, bx = jnp.dtype(mdt).itemsize, jnp.dtype(xdt).itemsize
    work_bytes = C * HW * 4 if direct else ks * ks * C * HW * bm
    est = (C * apad_w * bm + work_bytes
           + 2 * 2 * C * HW * bx                     # x / out blocks, double-buffered
           + 2 * 2 * C * (ks * ks * C) * bm          # w1 / w2, double-buffered
           + 2 * (int(masks.size) * bm + 2 * C * 4))  # masks + biases (small)
    vmem_limit = int(min(max(est * 3 // 2, 32 * 1024 * 1024), 100 * 1024 * 1024))

    kern = functools.partial(_res_layer_kernel, ks=ks, dil_h=dh, dil_w=dw,
                             H=H, W=W, lpad=lpad, direct=direct)
    const = lambda n: (0, 0)
    work_scratch = (pltpu.VMEM((C, HW), jnp.float32) if direct
                    else pltpu.VMEM((ks * ks * C, HW), mdt))

    out_flat = pl.pallas_call(
        kern,
        out_shape=jax.ShapeDtypeStruct((N, C, HW), xdt),
        grid=(N,),
        in_specs=[
            pl.BlockSpec((1, C, HW), lambda n: (n, 0, 0)),      # x
            pl.BlockSpec((masks.shape[0], HW), const),          # column masks
            pl.BlockSpec((C, ks * ks * C), const),              # w1 (BN1 scale folded)
            pl.BlockSpec((C, 1), const),                        # bn1 bias
            pl.BlockSpec((C, ks * ks * C), const),              # w2 (BN2 scale folded)
            pl.BlockSpec((C, 1), const),                        # bn2 bias
        ],
        out_specs=pl.BlockSpec((1, C, HW), lambda n: (n, 0, 0)),
        scratch_shapes=[
            pltpu.VMEM((C, apad_w), mdt),        # zero-padded activation staging
            work_scratch,                        # f32 accumulator OR im2col slab
        ],
        compiler_params=pltpu.CompilerParams(
            dimension_semantics=("parallel",),
            vmem_limit_bytes=vmem_limit),
    )(x_flat, masks, w1, b1, w2, b2)
    return out_flat.reshape(N, C, H, W)


# ---------------- plain-JAX reference (for correctness check) ----------------
def _ref_conv_block(x, w_oihw, gamma, beta, mean, var, *, dh, dw, eps=1e-5):
    ks = w_oihw.shape[-1]
    ph, pw = (ks // 2) * dh, (ks // 2) * dw
    y = lax.conv_general_dilated(
        x, w_oihw, window_strides=(1, 1),
        padding=((ph, ph), (pw, pw)), rhs_dilation=(dh, dw),
        dimension_numbers=("NCHW", "OIHW", "NCHW"))
    scale = gamma / jnp.sqrt(var + eps)
    bias = beta - mean * scale
    y = y * scale[None, :, None, None] + bias[None, :, None, None]
    return jnp.where(y >= 0, y, 0.1 * y)


def res_layer_ref(x_nchw, params, *, dilation=1):
    dh, dw = (dilation, dilation) if isinstance(dilation, int) else tuple(dilation)
    x32 = x_nchw.astype(jnp.float32)
    o = _ref_conv_block(x32, params["w1"].astype(jnp.float32),
                        *params["bn1"], dh=dh, dw=dw)
    o = _ref_conv_block(o, params["w2"].astype(jnp.float32),
                        *params["bn2"], dh=dh, dw=dw)
    return x32 + o


if __name__ == "__main__":
    key = jax.random.PRNGKey(0)
    KS = 3

    def make_params(k, C):
        k1, k2, k3, k4 = jax.random.split(k, 4)

        def bn_params(kk):
            ka, kb, kc, kd = jax.random.split(kk, 4)
            gamma = jax.random.uniform(ka, (C,), jnp.float32, 0.5, 1.5)
            beta = 0.1 * jax.random.normal(kb, (C,), jnp.float32)
            mean = 0.1 * jax.random.normal(kc, (C,), jnp.float32)
            var = jax.random.uniform(kd, (C,), jnp.float32, 0.5, 1.5)
            return (gamma, beta, mean, var)

        bound = 1.0 / ((C * KS * KS) ** 0.5)
        return {
            "w1": jax.random.uniform(k1, (C, C, KS, KS), jnp.float32, -bound, bound),
            "w2": jax.random.uniform(k2, (C, C, KS, KS), jnp.float32, -bound, bound),
            "bn1": bn_params(k3),
            "bn2": bn_params(k4),
        }

    kx, kp, kx2, kp2 = jax.random.split(key, 4)

    # --- small-C config (im2col path), strict f32 MXU path ---
    N, C, H, W = 2, 8, 16, 16
    x = jax.random.normal(kx, (N, C, H, W), jnp.float32)
    params = make_params(kp, C)

    out = jax.block_until_ready(
        res_layer_forward(x, params, ks=KS, dilation=1, use_bf16_matmul=False))
    ref = jax.block_until_ready(res_layer_ref(x, params, dilation=1))
    assert out.shape == (N, C, H, W)
    assert jnp.allclose(out, ref, atol=1e-4, rtol=1e-4), float(jnp.abs(out - ref).max())

    # anisotropic dilation (1, 2) as used inside DilatedResNet, strict f32
    out = jax.block_until_ready(
        res_layer_forward(x, params, ks=KS, dilation=(1, 2), use_bf16_matmul=False))
    ref = jax.block_until_ready(res_layer_ref(x, params, dilation=(1, 2)))
    assert jnp.allclose(out, ref, atol=1e-4, rtol=1e-4), float(jnp.abs(out - ref).max())

    # bf16 activations/weights on the MXU (f32 accumulation and f32 epilogue)
    x_bf = x.astype(jnp.bfloat16)
    out_bf = jax.block_until_ready(
        res_layer_forward(x_bf, params, ks=KS, dilation=(1, 2)))
    ref_bf = jax.block_until_ready(
        res_layer_ref(x_bf.astype(jnp.float32), params, dilation=(1, 2)))
    assert out_bf.dtype == jnp.bfloat16
    err = jnp.abs(out_bf.astype(jnp.float32) - ref_bf)
    assert jnp.allclose(out_bf.astype(jnp.float32), ref_bf, atol=5e-2, rtol=5e-2), \
        float(err.max())

    # --- large-C config: direct 9-tap accumulation path, bf16 MXU on f32 I/O ---
    N2, C2, H2, W2 = 1, 128, 8, 16
    x2 = jax.random.normal(kx2, (N2, C2, H2, W2), jnp.float32)
    params2 = make_params(kp2, C2)
    out2 = jax.block_until_ready(
        res_layer_forward(x2, params2, ks=KS, dilation=(1, 2)))  # bf16 matmul default
    ref2 = jax.block_until_ready(res_layer_ref(x2, params2, dilation=(1, 2)))
    assert jnp.allclose(out2, ref2, atol=5e-2, rtol=5e-2), \
        float(jnp.abs(out2 - ref2).max())

    print("KERNEL_OK")
</pallas_src>

<mosaic_0001>
module attributes {stable_mosaic.version = 11 : i64} {
  func.func @_res_layer_kernel(%arg0: i32, %arg1: memref<1x8x256xf32, #tpu.memory_space<vmem>>, %arg2: memref<2x256xf32, #tpu.memory_space<vmem>>, %arg3: memref<8x72xf32, #tpu.memory_space<vmem>>, %arg4: memref<8x1xf32, #tpu.memory_space<vmem>>, %arg5: memref<8x72xf32, #tpu.memory_space<vmem>>, %arg6: memref<8x1xf32, #tpu.memory_space<vmem>>, %arg7: memref<1x8x256xf32, #tpu.memory_space<vmem>>, %arg8: memref<8x401xf32, #tpu.memory_space<vmem>>, %arg9: memref<72x256xf32, #tpu.memory_space<vmem>>) attributes {dimension_semantics = [#tpu.dimension_semantics<parallel>], iteration_bounds = array<i64: 2>, scalar_prefetch = 0 : i64, scratch_operands = 2 : i64, tpu.core_type = #tpu.core_type<tc>, window_params = [{transform_indices = @transform_0, window_bounds = array<i64: 1, 8, 256>}, {pipeline_mode = #tpu.pipeline_mode<synchronous>, transform_indices = @transform_1, window_bounds = array<i64: 2, 256>}, {pipeline_mode = #tpu.pipeline_mode<synchronous>, transform_indices = @transform_2, window_bounds = array<i64: 8, 72>}, {pipeline_mode = #tpu.pipeline_mode<synchronous>, transform_indices = @transform_3, window_bounds = array<i64: 8, 1>}, {pipeline_mode = #tpu.pipeline_mode<synchronous>, transform_indices = @transform_4, window_bounds = array<i64: 8, 72>}, {pipeline_mode = #tpu.pipeline_mode<synchronous>, transform_indices = @transform_5, window_bounds = array<i64: 8, 1>}, {transform_indices = @transform_6, window_bounds = array<i64: 1, 8, 256>}]} {
    %cst = arith.constant 0.000000e+00 : f32
    %0 = vector.broadcast %cst : f32 to vector<8x128xf32>
    %c0 = arith.constant 0 : index
    %c0_0 = arith.constant 0 : index
    %1 = vector.load %arg8[%c0, %c0_0] : memref<8x401xf32, #tpu.memory_space<vmem>>, vector<8x128xf32>
    tpu.vector_store %arg8[%c0, %c0_0], %0 {strides = array<i32>} : memref<8x401xf32, #tpu.memory_space<vmem>>, vector<8x128xf32>,
    %cst_1 = arith.constant 0.000000e+00 : f32
    %2 = vector.broadcast %cst_1 : f32 to vector<8x17xf32>
    %c0_2 = arith.constant 0 : index
    %c384 = arith.constant 384 : index
    %3 = vector.load %arg8[%c0_2, %c384] : memref<8x401xf32, #tpu.memory_space<vmem>>, vector<8x17xf32>
    tpu.vector_store %arg8[%c0_2, %c384], %2 {strides = array<i32>} : memref<8x401xf32, #tpu.memory_space<vmem>>, vector<8x17xf32>,
    %c0_3 = arith.constant 0 : index
    %c0_4 = arith.constant 0 : index
    %c0_5 = arith.constant 0 : index
    %4 = vector.load %arg1[%c0_3, %c0_4, %c0_5] : memref<1x8x256xf32, #tpu.memory_space<vmem>>, vector<1x8x256xf32>
    %5 = vector.shape_cast %4 : vector<1x8x256xf32> to vector<8x256xf32>
    %c0_6 = arith.constant 0 : index
    %c128 = arith.constant 128 : index
    %6 = vector.load %arg8[%c0_6, %c128] : memref<8x401xf32, #tpu.memory_space<vmem>>, vector<8x256xf32>
    tpu.vector_store %arg8[%c0_6, %c128], %5 {strides = array<i32>} : memref<8x401xf32, #tpu.memory_space<vmem>>, vector<8x256xf32>,
    %c0_7 = arith.constant 0 : index
    %c111 = arith.constant 111 : index
    %7 = vector.load %arg8[%c0_7, %c111] : memref<8x401xf32, #tpu.memory_space<vmem>>, vector<8x256xf32>
    %c0_8 = arith.constant 0 : index
    %c0_9 = arith.constant 0 : index
    %8 = vector.load %arg2[%c0_8, %c0_9] : memref<2x256xf32, #tpu.memory_space<vmem>>, vector<1x256xf32>
    %9 = vector.broadcast %8 : vector<1x256xf32> to vector<8x256xf32>
    %10 = arith.mulf %7, %9 : vector<8x256xf32>
    %c0_10 = arith.constant 0 : index
    %c0_11 = arith.constant 0 : index
    %11 = vector.load %arg9[%c0_10, %c0_11] : memref<72x256xf32, #tpu.memory_space<vmem>>, vector<8x256xf32>
    tpu.vector_store %arg9[%c0_10, %c0_11], %10 {strides = array<i32>} : memref<72x256xf32, #tpu.memory_space<vmem>>, vector<8x256xf32>,
    %c0_12 = arith.constant 0 : index
    %c112 = arith.constant 112 : index
    %12 = vector.load %arg8[%c0_12, %c112] : memref<8x401xf32, #tpu.memory_space<vmem>>, vector<8x256xf32>
    %c8 = arith.constant 8 : index
    %c0_13 = arith.constant 0 : index
    %13 = vector.load %arg9[%c8, %c0_13] : memref<72x256xf32, #tpu.memory_space<vmem>>, vector<8x256xf32>
    tpu.vector_store %arg9[%c8, %c0_13], %12 {strides = array<i32>} : memref<72x256xf32, #tpu.memory_space<vmem>>, vector<8x256xf32>,
    %c0_14 = arith.constant 0 : index
    %c113 = arith.constant 113 : index
    %14 = vector.load %arg8[%c0_14, %c113] : memref<8x401xf32, #tpu.memory_space<vmem>>, vector<8x256xf32>
    %c1 = arith.constant 1 : index
    %c0_15 = arith.constant 0 : index
    %15 = vector.load %arg2[%c1, %c0_15] : memref<2x256xf32, #tpu.memory_space<vmem>>, vector<1x256xf32>
    %16 = vector.broadcast %15 : vector<1x256xf32> to vector<8x256xf32>
    %17 = arith.mulf %14, %16 : vector<8x256xf32>
    %c16 = arith.constant 16 : index
    %c0_16 = arith.constant 0 : index
    %18 = vector.load %arg9[%c16, %c0_16] : memref<72x256xf32, #tpu.memory_space<vmem>>, vector<8x256xf32>
    tpu.vector_store %arg9[%c16, %c0_16], %17 {strides = array<i32>} : memref<72x256xf32, #tpu.memory_space<vmem>>, vector<8x256xf32>,
    %c0_17 = arith.constant 0 : index
    %c127 = arith.constant 127 : index
    %19 = vector.load %arg8[%c0_17, %c127] : memref<8x401xf32, #tpu.memory_space<vmem>>, vector<8x256xf32>
    %c0_18 = arith.constant 0 : index
    %c0_19 = arith.constant 0 : index
    %20 = vector.load %arg2[%c0_18, %c0_19] : memref<2x256xf32, #tpu.memory_space<vmem>>, vector<1x256xf32>
    %21 = vector.broadcast %20 : vector<1x256xf32> to vector<8x256xf32>
    %22 = arith.mulf %19, %21 : vector<8x256xf32>
    %c24 = arith.constant 24 : index
    %c0_20 = arith.constant 0 : index
    %23 = vector.load %arg9[%c24, %c0_20] : memref<72x256xf32, #tpu.memory_space<vmem>>, vector<8x256xf32>
    tpu.vector_store %arg9[%c24, %c0_20], %22 {strides = array<i32>} : memref<72x256xf32, #tpu.memory_space<vmem>>, vector<8x256xf32>,
    %c0_21 = arith.constant 0 : index
    %c128_22 = arith.constant 128 : index
    %24 = vector.load %arg8[%c0_21, %c128_22] : memref<8x401xf32, #tpu.memory_space<vmem>>, vector<8x256xf32>
    %c32 = arith.constant 32 : index
    %c0_23 = arith.constant 0 : index
    %25 = vector.load %arg9[%c32, %c0_23] : memref<72x256xf32, #tpu.memory_space<vmem>>, vector<8x256xf32>
    tpu.vector_store %arg9[%c32, %c0_23], %24 {strides = array<i32>} : memref<72x256xf32, #tpu.memory_space<vmem>>, vector<8x256xf32>,
    %c0_24 = arith.constant 0 : index
    %c129 = arith.constant 129 : index
    %26 = vector.load %arg8[%c0_24, %c129] : memref<8x401xf32, #tpu.memory_space<vmem>>, vector<8x256xf32>
    %c1_25 = arith.constant 1 : index
    %c0_26 = arith.constant 0 : index
    %27 = vector.load %arg2[%c1_25, %c0_26] : memref<2x256xf32, #tpu.memory_space<vmem>>, vector<1x256xf32>
    %28 = vector.broadcast %27 : vector<1x256xf32> to vector<8x256xf32>
    %29 = arith.mulf %26, %28 : vector<8x256xf32>
    %c40 = arith.constant 40 : index
    %c0_27 = arith.constant 0 : index
    %30 = vector.load %arg9[%c40, %c0_27] : memref<72x256xf32, #tpu.memory_space<vmem>>, vector<8x256xf32>
    tpu.vector_store %arg9[%c40, %c0_27], %29 {strides = array<i32>} : memref<72x256xf32, #tpu.memory_space<vmem>>, vector<8x256xf32>,
    %c0_28 = arith.constant 0 : index
    %c143 = arith.constant 143 : index
    %31 = vector.load %arg8[%c0_28, %c143] : memref<8x401xf32, #tpu.memory_space<vmem>>, vector<8x256xf32>
    %c0_29 = arith.constant 0 : index
    %c0_30 = arith.constant 0 : index
    %32 = vector.load %arg2[%c0_29, %c0_30] : memref<2x256xf32, #tpu.memory_space<vmem>>, vector<1x256xf32>
    %33 = vector.broadcast %32 : vector<1x256xf32> to vector<8x256xf32>
    %34 = arith.mulf %31, %33 : vector<8x256xf32>
    %c48 = arith.constant 48 : index
    %c0_31 = arith.constant 0 : index
    %35 = vector.load %arg9[%c48, %c0_31] : memref<72x256xf32, #tpu.memory_space<vmem>>, vector<8x256xf32>
    tpu.vector_store %arg9[%c48, %c0_31], %34 {strides = array<i32>} : memref<72x256xf32, #tpu.memory_space<vmem>>, vector<8x256xf32>,
    %c0_32 = arith.constant 0 : index
    %c144 = arith.constant 144 : index
    %36 = vector.load %arg8[%c0_32, %c144] : memref<8x401xf32, #tpu.memory_space<vmem>>, vector<8x256xf32>
    %c56 = arith.constant 56 : index
    %c0_33 = arith.constant 0 : index
    %37 = vector.load %arg9[%c56, %c0_33] : memref<72x256xf32, #tpu.memory_space<vmem>>, vector<8x256xf32>
    tpu.vector_store %arg9[%c56, %c0_33], %36 {strides = array<i32>} : memref<72x256xf32, #tpu.memory_space<vmem>>, vector<8x256xf32>,
    %c0_34 = arith.constant 0 : index
    %c145 = arith.constant 145 : index
    %38 = vector.load %arg8[%c0_34, %c145] : memref<8x401xf32, #tpu.memory_space<vmem>>, vector<8x256xf32>
    %c1_35 = arith.constant 1 : index
    %c0_36 = arith.constant 0 : index
    %39 = vector.load %arg2[%c1_35, %c0_36] : memref<2x256xf32, #tpu.memory_space<vmem>>, vector<1x256xf32>
    %40 = vector.broadcast %39 : vector<1x256xf32> to vector<8x256xf32>
    %41 = arith.mulf %38, %40 : vector<8x256xf32>
    %c64 = arith.constant 64 : index
    %c0_37 = arith.constant 0 : index
    %42 = vector.load %arg9[%c64, %c0_37] : memref<72x256xf32, #tpu.memory_space<vmem>>, vector<8x256xf32>
    tpu.vector_store %arg9[%c64, %c0_37], %41 {strides = array<i32>} : memref<72x256xf32, #tpu.memory_space<vmem>>, vector<8x256xf32>,
    %c0_38 = arith.constant 0 : index
    %c0_39 = arith.constant 0 : index
    %43 = vector.load %arg3[%c0_38, %c0_39] : memref<8x72xf32, #tpu.memory_space<vmem>>, vector<8x72xf32>
    %c0_40 = arith.constant 0 : index
    %c0_41 = arith.constant 0 : index
    %44 = vector.load %arg9[%c0_40, %c0_41] : memref<72x256xf32, #tpu.memory_space<vmem>>, vector<72x256xf32>
    %cst_42 = arith.constant dense<0.000000e+00> : vector<8x256xf32>
    %45 = tpu.matmul %43, %44, %cst_42 {dimension_numbers = #tpu.dot_dimension_numbers<[1], [0], [0], [1], [0, 0, 1, 1], [], []>} : vector<8x72xf32>, vector<72x256xf32>, vector<8x256xf32> -> vector<8x256xf32>
    %c0_43 = arith.constant 0 : index
    %c0_44 = arith.constant 0 : index
    %46 = vector.load %arg4[%c0_43, %c0_44] : memref<8x1xf32, #tpu.memory_space<vmem>>, vector<8x1xf32>
    %47 = vector.broadcast %46 : vector<8x1xf32> to vector<8x256xf32>
    %48 = arith.addf %45, %47 : vector<8x256xf32>
    %cst_45 = arith.constant 1.000000e-01 : f32
    %49 = vector.broadcast %cst_45 : f32 to vector<8x256xf32>
    %50 = arith.mulf %49, %48 : vector<8x256xf32>
    %51 = arith.maximumf %48, %50 : vector<8x256xf32>
    %c0_46 = arith.constant 0 : index
    %c128_47 = arith.constant 128 : index
    %52 = vector.load %arg8[%c0_46, %c128_47] : memref<8x401xf32, #tpu.memory_space<vmem>>, vector<8x256xf32>
    tpu.vector_store %arg8[%c0_46, %c128_47], %51 {strides = array<i32>} : memref<8x401xf32, #tpu.memory_space<vmem>>, vector<8x256xf32>,
    %c0_48 = arith.constant 0 : index
    %c111_49 = arith.constant 111 : index
    %53 = vector.load %arg8[%c0_48, %c111_49] : memref<8x401xf32, #tpu.memory_space<vmem>>, vector<8x256xf32>
    %c0_50 = arith.constant 0 : index
    %c0_51 = arith.constant 0 : index
    %54 = vector.load %arg2[%c0_50, %c0_51] : memref<2x256xf32, #tpu.memory_space<vmem>>, vector<1x256xf32>
    %55 = vector.broadcast %54 : vector<1x256xf32> to vector<8x256xf32>
    %56 = arith.mulf %53, %55 : vector<8x256xf32>
    %c0_52 = arith.constant 0 : index
    %c0_53 = arith.constant 0 : index
    %57 = vector.load %arg9[%c0_52, %c0_53] : memref<72x256xf32, #tpu.memory_space<vmem>>, vector<8x256xf32>
    tpu.vector_store %arg9[%c0_52, %c0_53], %56 {strides = array<i32>} : memref<72x256xf32, #tpu.memory_space<vmem>>, vector<8x256xf32>,
    %c0_54 = arith.constant 0 : index
    %c112_55 = arith.constant 112 : index
    %58 = vector.load %arg8[%c0_54, %c112_55] : memref<8x401xf32, #tpu.memory_space<vmem>>, vector<8x256xf32>
    %c8_56 = arith.constant 8 : index
    %c0_57 = arith.constant 0 : index
    %59 = vector.load %arg9[%c8_56, %c0_57] : memref<72x256xf32, #tpu.memory_space<vmem>>, vector<8x256xf32>
    tpu.vector_store %arg9[%c8_56, %c0_57], %58 {strides = array<i32>} : memref<72x256xf32, #tpu.memory_space<vmem>>, vector<8x256xf32>,
    %c0_58 = arith.constant 0 : index
    %c113_59 = arith.constant 113 : index
    %60 = vector.load %arg8[%c0_58, %c113_59] : memref<8x401xf32, #tpu.memory_space<vmem>>, vector<8x256xf32>
    %c1_60 = arith.constant 1 : index
    %c0_61 = arith.constant 0 : index
    %61 = vector.load %arg2[%c1_60, %c0_61] : memref<2x256xf32, #tpu.memory_space<vmem>>, vector<1x256xf32>
    %62 = vector.broadcast %61 : vector<1x256xf32> to vector<8x256xf32>
    %63 = arith.mulf %60, %62 : vector<8x256xf32>
    %c16_62 = arith.constant 16 : index
    %c0_63 = arith.constant 0 : index
    %64 = vector.load %arg9[%c16_62, %c0_63] : memref<72x256xf32, #tpu.memory_space<vmem>>, vector<8x256xf32>
    tpu.vector_store %arg9[%c16_62, %c0_63], %63 {strides = array<i32>} : memref<72x256xf32, #tpu.memory_space<vmem>>, vector<8x256xf32>,
    %c0_64 = arith.constant 0 : index
    %c127_65 = arith.constant 127 : index
    %65 = vector.load %arg8[%c0_64, %c127_65] : memref<8x401xf32, #tpu.memory_space<vmem>>, vector<8x256xf32>
    %c0_66 = arith.constant 0 : index
    %c0_67 = arith.constant 0 : index
    %66 = vector.load %arg2[%c0_66, %c0_67] : memref<2x256xf32, #tpu.memory_space<vmem>>, vector<1x256xf32>
    %67 = vector.broadcast %66 : vector<1x256xf32> to vector<8x256xf32>
    %68 = arith.mulf %65, %67 : vector<8x256xf32>
    %c24_68 = arith.constant 24 : index
    %c0_69 = arith.constant 0 : index
    %69 = vector.load %arg9[%c24_68, %c0_69] : memref<72x256xf32, #tpu.memory_space<vmem>>, vector<8x256xf32>
    tpu.vector_store %arg9[%c24_68, %c0_69], %68 {strides = array<i32>} : memref<72x256xf32, #tpu.memory_space<vmem>>, vector<8x256xf32>,
    %c0_70 = arith.constant 0 : index
    %c128_71 = arith.constant 128 : index
    %70 = vector.load %arg8[%c0_70, %c128_71] : memref<8x401xf32, #tpu.memory_space<vmem>>, vector<8x256xf32>
    %c32_72 = arith.constant 32 : index
    %c0_73 = arith.constant 0 : index
    %71 = vector.load %arg9[%c32_72, %c0_73] : memref<72x256xf32, #tpu.memory_space<vmem>>, vector<8x256xf32>
    tpu.vector_store %arg9[%c32_72, %c0_73], %70 {strides = array<i32>} : memref<72x256xf32, #tpu.memory_space<vmem>>, vector<8x256xf32>,
    %c0_74 = arith.constant 0 : index
    %c129_75 = arith.constant 129 : index
    %72 = vector.load %arg8[%c0_74, %c129_75] : memref<8x401xf32, #tpu.memory_space<vmem>>, vector<8x256xf32>
    %c1_76 = arith.constant 1 : index
    %c0_77 = arith.constant 0 : index
    %73 = vector.load %arg2[%c1_76, %c0_77] : memref<2x256xf32, #tpu.memory_space<vmem>>, vector<1x256xf32>
    %74 = vector.broadcast %73 : vector<1x256xf32> to vector<8x256xf32>
    %75 = arith.mulf %72, %74 : vector<8x256xf32>
    %c40_78 = arith.constant 40 : index
    %c0_79 = arith.constant 0 : index
    %76 = vector.load %arg9[%c40_78, %c0_79] : memref<72x256xf32, #tpu.memory_space<vmem>>, vector<8x256xf32>
    tpu.vector_store %arg9[%c40_78, %c0_79], %75 {strides = array<i32>} : memref<72x256xf32, #tpu.memory_space<vmem>>, vector<8x256xf32>,
    %c0_80 = arith.constant 0 : index
    %c143_81 = arith.constant 143 : index
    %77 = vector.load %arg8[%c0_80, %c143_81] : memref<8x401xf32, #tpu.memory_space<vmem>>, vector<8x256xf32>
    %c0_82 = arith.constant 0 : index
    %c0_83 = arith.constant 0 : index
    %78 = vector.load %arg2[%c0_82, %c0_83] : memref<2x256xf32, #tpu.memory_space<vmem>>, vector<1x256xf32>
    %79 = vector.broadcast %78 : vector<1x256xf32> to vector<8x256xf32>
    %80 = arith.mulf %77, %79 : vector<8x256xf32>
    %c48_84 = arith.constant 48 : index
    %c0_85 = arith.constant 0 : index
    %81 = vector.load %arg9[%c48_84, %c0_85] : memref<72x256xf32, #tpu.memory_space<vmem>>, vector<8x256xf32>
    tpu.vector_store %arg9[%c48_84, %c0_85], %80 {strides = array<i32>} : memref<72x256xf32, #tpu.memory_space<vmem>>, vector<8x256xf32>,
    %c0_86 = arith.constant 0 : index
    %c144_87 = arith.constant 144 : index
    %82 = vector.load %arg8[%c0_86, %c144_87] : memref<8x401xf32, #tpu.memory_space<vmem>>, vector<8x256xf32>
    %c56_88 = arith.constant 56 : index
    %c0_89 = arith.constant 0 : index
    %83 = vector.load %arg9[%c56_88, %c0_89] : memref<72x256xf32, #tpu.memory_space<vmem>>, vector<8x256xf32>
    tpu.vector_store %arg9[%c56_88, %c0_89], %82 {strides = array<i32>} : memref<72x256xf32, #tpu.memory_space<vmem>>, vector<8x256xf32>,
    %c0_90 = arith.constant 0 : index
    %c145_91 = arith.constant 145 : index
    %84 = vector.load %arg8[%c0_90, %c145_91] : memref<8x401xf32, #tpu.memory_space<vmem>>, vector<8x256xf32>
    %c1_92 = arith.constant 1 : index
    %c0_93 = arith.constant 0 : index
    %85 = vector.load %arg2[%c1_92, %c0_93] : memref<2x256xf32, #tpu.memory_space<vmem>>, vector<1x256xf32>
    %86 = vector.broadcast %85 : vector<1x256xf32> to vector<8x256xf32>
    %87 = arith.mulf %84, %86 : vector<8x256xf32>
    %c64_94 = arith.constant 64 : index
    %c0_95 = arith.constant 0 : index
    %88 = vector.load %arg9[%c64_94, %c0_95] : memref<72x256xf32, #tpu.memory_space<vmem>>, vector<8x256xf32>
    tpu.vector_store %arg9[%c64_94, %c0_95], %87 {strides = array<i32>} : memref<72x256xf32, #tpu.memory_space<vmem>>, vector<8x256xf32>,
    %c0_96 = arith.constant 0 : index
    %c0_97 = arith.constant 0 : index
    %89 = vector.load %arg5[%c0_96, %c0_97] : memref<8x72xf32, #tpu.memory_space<vmem>>, vector<8x72xf32>
    %c0_98 = arith.constant 0 : index
    %c0_99 = arith.constant 0 : index
    %90 = vector.load %arg9[%c0_98, %c0_99] : memref<72x256xf32, #tpu.memory_space<vmem>>, vector<72x256xf32>
    %cst_100 = arith.constant dense<0.000000e+00> : vector<8x256xf32>
    %91 = tpu.matmul %89, %90, %cst_100 {dimension_numbers = #tpu.dot_dimension_numbers<[1], [0], [0], [1], [0, 0, 1, 1], [], []>} : vector<8x72xf32>, vector<72x256xf32>, vector<8x256xf32> -> vector<8x256xf32>
    %c0_101 = arith.constant 0 : index
    %c0_102 = arith.constant 0 : index
    %92 = vector.load %arg6[%c0_101, %c0_102] : memref<8x1xf32, #tpu.memory_space<vmem>>, vector<8x1xf32>
    %93 = vector.broadcast %92 : vector<8x1xf32> to vector<8x256xf32>
    %94 = arith.addf %91, %93 : vector<8x256xf32>
    %cst_103 = arith.constant 1.000000e-01 : f32
    %95 = vector.broadcast %cst_103 : f32 to vector<8x256xf32>
    %96 = arith.mulf %95, %94 : vector<8x256xf32>
    %97 = arith.maximumf %94, %96 : vector<8x256xf32>
    %c0_104 = arith.constant 0 : index
    %c0_105 = arith.constant 0 : index
    %c0_106 = arith.constant 0 : index
    %98 = vector.load %arg1[%c0_104, %c0_105, %c0_106] : memref<1x8x256xf32, #tpu.memory_space<vmem>>, vector<1x8x256xf32>
    %99 = vector.shape_cast %98 : vector<1x8x256xf32> to vector<8x256xf32>
    %100 = arith.addf %99, %97 : vector<8x256xf32>
    %c0_107 = arith.constant 0 : index
    %c0_108 = arith.constant 0 : index
    %c0_109 = arith.constant 0 : index
    %101 = vector.load %arg7[%c0_107, %c0_108, %c0_109] : memref<1x8x256xf32, #tpu.memory_space<vmem>>, vector<1x8x256xf32>
    %102 = vector.shape_cast %101 : vector<1x8x256xf32> to vector<8x256xf32>
    %103 = vector.shape_cast %100 : vector<8x256xf32> to vector<1x8x256xf32>
    tpu.vector_store %arg7[%c0_107, %c0_108, %c0_109], %103 {strides = array<i32>} : memref<1x8x256xf32, #tpu.memory_space<vmem>>, vector<1x8x256xf32>,
    return
  }
  func.func @transform_0(%arg0: i32) -> (i32, i32, i32) {
    %c0_i32 = arith.constant 0 : i32
    %c0_i32_0 = arith.constant 0 : i32
    %c0_i32_1 = arith.constant 0 : i32
    return %arg0, %c0_i32, %c0_i32_0 : i32, i32, i32
  }
  func.func @transform_1(%arg0: i32) -> (i32, i32) {
    %c0_i32 = arith.constant 0 : i32
    %c0_i32_0 = arith.constant 0 : i32
    %c0_i32_1 = arith.constant 0 : i32
    return %c0_i32, %c0_i32_0 : i32, i32
  }
  func.func @transform_2(%arg0: i32) -> (i32, i32) {
    %c0_i32 = arith.constant 0 : i32
    %c0_i32_0 = arith.constant 0 : i32
    %c0_i32_1 = arith.constant 0 : i32
    return %c0_i32, %c0_i32_0 : i32, i32
  }
  func.func @transform_3(%arg0: i32) -> (i32, i32) {
    %c0_i32 = arith.constant 0 : i32
    %c0_i32_0 = arith.constant 0 : i32
    %c0_i32_1 = arith.constant 0 : i32
    return %c0_i32, %c0_i32_0 : i32, i32
  }
  func.func @transform_4(%arg0: i32) -> (i32, i32) {
    %c0_i32 = arith.constant 0 : i32
    %c0_i32_0 = arith.constant 0 : i32
    %c0_i32_1 = arith.constant 0 : i32
    return %c0_i32, %c0_i32_0 : i32, i32
  }
  func.func @transform_5(%arg0: i32) -> (i32, i32) {
    %c0_i32 = arith.constant 0 : i32
    %c0_i32_0 = arith.constant 0 : i32
    %c0_i32_1 = arith.constant 0 : i32
    return %c0_i32, %c0_i32_0 : i32, i32
  }
  func.func @transform_6(%arg0: i32) -> (i32, i32, i32) {
    %c0_i32 = arith.constant 0 : i32
    %c0_i32_0 = arith.constant 0 : i32
    %c0_i32_1 = arith.constant 0 : i32
    return %arg0, %c0_i32, %c0_i32_0 : i32, i32, i32
  }
}

</mosaic_0001>

<llo_original>
// kernel: tpu_custom_call.1
$region0: #{tpu_custom_call.1}
  #allocation0 [shape = 'u32[]', space=smem, size = 0x4, offset = 0x4, fixed_abs, tag = 'smem constant byte address 0x4 - core index']
  #allocation1 [shape = 'u32[72,128]{1,0:T(1,128)}', space=vmem, size = 0x9000, scoped, tag = 'internal scratch']
  #allocation2 [shape = 'f32[8,401]{1,0:T(8,128)}', space=vmem, size = 0x4000, scoped, tag = 'scratch operand']
  #allocation3 [shape = 'f32[72,256]{1,0:T(8,128)}', space=vmem, size = 0x12000, scoped, tag = 'scratch operand']
  %s0 = inlined_call_operand.hbm [shape: f32[2,8,256], index: 0, kind: input, shape index: {}]
  %s1 = inlined_call_operand.hbm [shape: f32[2,256], index: 1, kind: input, shape index: {}]
  %s2 = inlined_call_operand.vmem [shape: f32[8,72], index: 2, kind: input, shape index: {}]
  %s3 = inlined_call_operand.vmem [shape: f32[8,1], index: 3, kind: input, shape index: {}]
  %s4 = inlined_call_operand.vmem [shape: f32[8,72], index: 4, kind: input, shape index: {}]
  %s5 = inlined_call_operand.vmem [shape: f32[8,1], index: 5, kind: input, shape index: {}]
  %s6 = inlined_call_operand.hbm [shape: f32[2,8,256], index: 6, kind: output, shape index: {}]
  %s7 = sld [smem:[#allocation0]]
  $region65: #{tpu_custom_call.1} parent=0
    _
  %s9 = ssub.s32 1, %s7
  %s10 = scalar_select 0, %s9, %s7
  $region1: #{tpu_custom_call.1} parent=0
    #allocation4 [shape = 'u8[16384]{0}', space=vmem, size = 0x4000, scoped, tag = 'input window, operand 0']
    #allocation5 [shape = 's32[2]{0}', space=sflag, size = 0x8, scoped, tag = 'scoped memory for tpu_custom_call.1']
    #allocation6 [shape = 's32[2]{0}', space=sflag, size = 0x8, scoped, tag = 'scoped memory for tpu_custom_call.1']
    #allocation7 [shape = 'u8[2048]{0}', space=vmem, size = 0x800, scoped, tag = 'input window, operand 1, single buffered']
    #allocation8 [shape = 's32[1]{0}', space=sflag, size = 0x4, scoped, tag = 'scoped memory for tpu_custom_call.1']
    #allocation9 [shape = 'u8[16384]{0}', space=vmem, size = 0x4000, scoped, tag = 'output window, operand 0']
    %11 = vsyncpa [#allocation5], 0
    %s12 = scalar_lea.sflag [#allocation5], 1
    %13 = vsyncpa %s12, 0
    %14 = vsyncpa [#allocation8], 0
    %15 = vsyncpa [#allocation6], 0
    %s16 = scalar_lea.sflag [#allocation6], 1
    %17 = vsyncpa %s16, 0
    loop: start=0, step=1, limit=4
    $region2: #{tpu_custom_call.1} parent=1 // loop_pre_header
      _
    $region3: #{tpu_custom_call.1} parent=1 // loop_header
      %s19 = sphi 0, %s23
      %p20 = scmp.ge.s32.totalorder %s19, 4
      %s29 = sphi 0, %s31
      %s32 = sphi 0, %s29
      %s33 = sphi 0, %s32
      %s49 = sphi 0, %s33
      %s53 = sphi 0, %s53
      %s55 = sphi 0, %s53
      %s56 = sphi 0, %s55
      %s70 = sphi 0, %s56
      %s74 = sphi 0, %s74
      %s76 = sphi 0, %s74
      %s77 = sphi 0, %s76
      %s91 = sphi 0, %s77
      %s95 = sphi 0, %s95
      %s97 = sphi 0, %s95
      %s98 = sphi 0, %s97
      %s112 = sphi 0, %s98
      %s116 = sphi 0, %s116
      %s118 = sphi 0, %s116
      %s119 = sphi 0, %s118
      %s133 = sphi 0, %s119
      %s137 = sphi 0, %s137
      %s139 = sphi 0, %s137
      %s140 = sphi 0, %s139
      %s154 = sphi 0, %s140
      %s160 = sphi 0, %s162
      %s163 = sphi 0, %s160
      %s164 = sphi 0, %s163
      %s180 = sphi 0, %s164
    $region4: #{tpu_custom_call.1} parent=1 // loop_header_branch
      %22 = sbr.rel (%p20) target = $region8
    $region5: #{tpu_custom_call.1} parent=1 // loop_body
      %s24 = ssub.s32 %s19, 1
      %s25 = ssub.s32 %s19, 2
      %s26 = sadd.s32 %s19, 1
      %s27 = ssub.s32 %s19, %s26
      %p28 = scmp.eq.s32.totalorder %s27, 0
      %s30 = sadd.s32 %s29, 1
      %s31 = scalar_select %p28, %s29, %s30
      %p34 = pneg %p28
      %p35 = scmp.eq.s32.totalorder %s19, 1
      %p36 = por %p34, %p35
      %p37 = scmp.ne.s32.totalorder %s29, %s32
      %p38 = scmp.eq.s32.totalorder %s19, 0
      %p39 = por %p37, %p38
      %p40 = scmp.ne.s32.totalorder %s29, %s32
      %p41 = scmp.eq.s32.totalorder %s24, 1
      %p42 = por %p40, %p41
      %p43 = scmp.ne.s32.totalorder %s32, %s33
      %p44 = scmp.eq.s32.totalorder %s24, 0
      %p45 = por %p43, %p44
      %p46 = scmp.ne.s32.totalorder %s32, %s33
      %p47 = scmp.eq.s32.totalorder %s25, 1
      %p48 = por %p46, %p47
      %p50 = scmp.ne.s32.totalorder %s33, %s49
      %p51 = scmp.eq.s32.totalorder %s25, 0
      %p52 = por %p50, %p51
      %s54 = sadd.s32 %s53, 1
      %p57 = scmp.eq.s32.totalorder %s19, 1
      %p58 = scmp.ne.s32.totalorder %s53, %s55
      %p59 = scmp.eq.s32.totalorder %s19, 0
      %p60 = por %p58, %p59
      %p61 = scmp.ne.s32.totalorder %s53, %s55
      %p62 = scmp.eq.s32.totalorder %s24, 1
      %p63 = por %p61, %p62
      %p64 = scmp.ne.s32.totalorder %s55, %s56
      %p65 = scmp.eq.s32.totalorder %s24, 0
      %p66 = por %p64, %p65
      %p67 = scmp.ne.s32.totalorder %s55, %s56
      %p68 = scmp.eq.s32.totalorder %s25, 1
      %p69 = por %p67, %p68
      %p71 = scmp.ne.s32.totalorder %s56, %s70
      %p72 = scmp.eq.s32.totalorder %s25, 0
      %p73 = por %p71, %p72
      %s75 = sadd.s32 %s74, 1
      %p78 = scmp.eq.s32.totalorder %s19, 1
      %p79 = scmp.ne.s32.totalorder %s74, %s76
      %p80 = scmp.eq.s32.totalorder %s19, 0
      %p81 = por %p79, %p80
      %p82 = scmp.ne.s32.totalorder %s74, %s76
      %p83 = scmp.eq.s32.totalorder %s24, 1
      %p84 = por %p82, %p83
      %p85 = scmp.ne.s32.totalorder %s76, %s77
      %p86 = scmp.eq.s32.totalorder %s24, 0
      %p87 = por %p85, %p86
      %p88 = scmp.ne.s32.totalorder %s76, %s77
      %p89 = scmp.eq.s32.totalorder %s25, 1
      %p90 = por %p88, %p89
      %p92 = scmp.ne.s32.totalorder %s77, %s91
      %p93 = scmp.eq.s32.totalorder %s25, 0
      %p94 = por %p92, %p93
      %s96 = sadd.s32 %s95, 1
      %p99 = scmp.eq.s32.totalorder %s19, 1
      %p100 = scmp.ne.s32.totalorder %s95, %s97
      %p101 = scmp.eq.s32.totalorder %s19, 0
      %p102 = por %p100, %p101
      %p103 = scmp.ne.s32.totalorder %s95, %s97
      %p104 = scmp.eq.s32.totalorder %s24, 1
      %p105 = por %p103, %p104
      %p106 = scmp.ne.s32.totalorder %s97, %s98
      %p107 = scmp.eq.s32.totalorder %s24, 0
      %p108 = por %p106, %p107
      %p109 = scmp.ne.s32.totalorder %s97, %s98
      %p110 = scmp.eq.s32.totalorder %s25, 1
      %p111 = por %p109, %p110
      %p113 = scmp.ne.s32.totalorder %s98, %s112
      %p114 = scmp.eq.s32.totalorder %s25, 0
      %p115 = por %p113, %p114
      %s117 = sadd.s32 %s116, 1
      %p120 = scmp.eq.s32.totalorder %s19, 1
      %p121 = scmp.ne.s32.totalorder %s116, %s118
      %p122 = scmp.eq.s32.totalorder %s19, 0
      %p123 = por %p121, %p122
      %p124 = scmp.ne.s32.totalorder %s116, %s118
      %p125 = scmp.eq.s32.totalorder %s24, 1
      %p126 = por %p124, %p125
      %p127 = scmp.ne.s32.totalorder %s118, %s119
      %p128 = scmp.eq.s32.totalorder %s24, 0
      %p129 = por %p127, %p128
      %p130 = scmp.ne.s32.totalorder %s118, %s119
      %p131 = scmp.eq.s32.totalorder %s25, 1
      %p132 = por %p130, %p131
      %p134 = scmp.ne.s32.totalorder %s119, %s133
      %p135 = scmp.eq.s32.totalorder %s25, 0
      %p136 = por %p134, %p135
      %s138 = sadd.s32 %s137, 1
      %p141 = scmp.eq.s32.totalorder %s19, 1
      %p142 = scmp.ne.s32.totalorder %s137, %s139
      %p143 = scmp.eq.s32.totalorder %s19, 0
      %p144 = por %p142, %p143
      %p145 = scmp.ne.s32.totalorder %s137, %s139
      %p146 = scmp.eq.s32.totalorder %s24, 1
      %p147 = por %p145, %p146
      %p148 = scmp.ne.s32.totalorder %s139, %s140
      %p149 = scmp.eq.s32.totalorder %s24, 0
      %p150 = por %p148, %p149
      %p151 = scmp.ne.s32.totalorder %s139, %s140
      %p152 = scmp.eq.s32.totalorder %s25, 1
      %p153 = por %p151, %p152
      %p155 = scmp.ne.s32.totalorder %s140, %s154
      %p156 = scmp.eq.s32.totalorder %s25, 0
      %p157 = por %p155, %p156
      %s158 = ssub.s32 %s19, %s26
      %p159 = scmp.eq.s32.totalorder %s158, 0
      %s161 = sadd.s32 %s160, 1
      %s162 = scalar_select %p159, %s160, %s161
      %p165 = pneg %p159
      %p166 = scmp.eq.s32.totalorder %s19, 1
      %p167 = por %p165, %p166
      %p168 = scmp.ne.s32.totalorder %s160, %s163
      %p169 = scmp.eq.s32.totalorder %s19, 0
      %p170 = por %p168, %p169
      %p171 = scmp.ne.s32.totalorder %s160, %s163
      %p172 = scmp.eq.s32.totalorder %s24, 1
      %p173 = por %p171, %p172
      %p174 = scmp.ne.s32.totalorder %s163, %s164
      %p175 = scmp.eq.s32.totalorder %s24, 0
      %p176 = por %p174, %p175
      %p177 = scmp.ne.s32.totalorder %s163, %s164
      %p178 = scmp.eq.s32.totalorder %s25, 1
      %p179 = por %p177, %p178
      %p181 = scmp.ne.s32.totalorder %s164, %s180
      %p182 = scmp.eq.s32.totalorder %s25, 0
      %p183 = por %p181, %p182
      %p184 = scmp.le.s32.totalorder 1, %s19
      %p185 = scmp.lt.s32.totalorder %s19, 3
      %p186 = pnand %p184, %p185
      %p187 = pneg %p186
      // Predicated region
      $region9: #{tpu_custom_call.1} parent=5 // pred_check
        _
      $region10: #{tpu_custom_call.1} parent=5 // pred_check_branch
        %189 = sbr.rel (%p186) target = $region12
      $region11: #{tpu_custom_call.1} parent=5 // pred_region
        %s190 = ssub.s32 %s19, 1
        // Predicated region
        $region13: #{tpu_custom_call.1} parent=11 // pred_check
          %p191 = pneg %p66
        $region14: #{tpu_custom_call.1} parent=11 // pred_check_branch
          %193 = sbr.rel (%p191) target = $region16
        $region15: #{tpu_custom_call.1} parent=11 // pred_region
          %195 = vsyncadd [#allocation8], 0
          %s197 = sshll.u32 %s1, 4
          %s198 = int_to_ptr.hbm [resolvable:$true] %s197
          %s199 = sshll.u32 [#allocation7], 4
          %s200 = int_to_ptr.vmem [resolvable:$true] %s199
          %202 = dma.hbm_to_vmem [thread:$0]  %s198, 64, %s200, [#allocation8]
        $region16: #{tpu_custom_call.1} parent=11 // pred_fallthru
          _
        // Predicated region
        $region17: #{tpu_custom_call.1} parent=11 // pred_check
          %p203 = pneg %p87
        $region18: #{tpu_custom_call.1} parent=11 // pred_check_branch
          %205 = sbr.rel (%p203) target = $region20
        $region19: #{tpu_custom_call.1} parent=11 // pred_region
          _
        $region20: #{tpu_custom_call.1} parent=11 // pred_fallthru
          _
        // Predicated region
        $region21: #{tpu_custom_call.1} parent=11 // pred_check
          %p206 = pneg %p108
        $region22: #{tpu_custom_call.1} parent=11 // pred_check_branch
          %208 = sbr.rel (%p206) target = $region24
        $region23: #{tpu_custom_call.1} parent=11 // pred_region
          _
        $region24: #{tpu_custom_call.1} parent=11 // pred_fallthru
          _
        // Predicated region
        $region25: #{tpu_custom_call.1} parent=11 // pred_check
          %p209 = pneg %p129
        $region26: #{tpu_custom_call.1} parent=11 // pred_check_branch
          %211 = sbr.rel (%p209) target = $region28
        $region27: #{tpu_custom_call.1} parent=11 // pred_region
          _
        $region28: #{tpu_custom_call.1} parent=11 // pred_fallthru
          _
        // Predicated region
        $region29: #{tpu_custom_call.1} parent=11 // pred_check
          %p212 = pneg %p150
        $region30: #{tpu_custom_call.1} parent=11 // pred_check_branch
          %214 = sbr.rel (%p212) target = $region32
        $region31: #{tpu_custom_call.1} parent=11 // pred_region
          _
        $region32: #{tpu_custom_call.1} parent=11 // pred_fallthru
          _
      $region12: #{tpu_custom_call.1} parent=5 // pred_fallthru
        _
      %p215 = scmp.lt.s32.totalorder %s19, 2
      // Predicated region
      $region33: #{tpu_custom_call.1} parent=5 // pred_check
        %p216 = pneg %p215
      $region34: #{tpu_custom_call.1} parent=5 // pred_check_branch
        %218 = sbr.rel (%p216) target = $region36
      $region35: #{tpu_custom_call.1} parent=5 // pred_region
        // Predicated region
        $region37: #{tpu_custom_call.1} parent=35 // pred_check
          %p219 = pneg %p39
        $region38: #{tpu_custom_call.1} parent=35 // pred_check_branch
          %221 = sbr.rel (%p219) target = $region40
        $region39: #{tpu_custom_call.1} parent=35 // pred_region
          %s222 = sand.u32 %s29, 1
          %s223 = scalar_lea.sflag [#allocation5], %s222
          %s224 = sand.u32 %s29, 1
          %s225 = smul.addr %s224, 16
          %s226 = scalar_lea.vmem [#allocation4], %s225
          %228 = vsyncadd %s223, 0
          %s229 = smul.addr %s19, 2
          %s230 = smul.addr %s229, 8
          %s231 = scalar_lea.hbm %s0, %s230
          %s233 = sshll.u32 %s231, 4
          %s234 = int_to_ptr.hbm [resolvable:$true] %s233
          %s235 = sshll.u32 %s226, 4
          %s236 = int_to_ptr.vmem [resolvable:$true] %s235
          %238 = dma.hbm_to_vmem [thread:$0]  %s234, 256, %s236, %s223
        $region40: #{tpu_custom_call.1} parent=35 // pred_fallthru
          _
      $region36: #{tpu_custom_call.1} parent=5 // pred_fallthru
        _
      %p239 = scmp.le.s32.totalorder 1, %s19
      %p240 = scmp.lt.s32.totalorder %s19, 3
      %p241 = pnand %p239, %p240
      %p242 = pneg %p241
      // Predicated region
      $region41: #{tpu_custom_call.1} parent=5 // pred_check
        _
      $region42: #{tpu_custom_call.1} parent=5 // pred_check_branch
        %244 = sbr.rel (%p241) target = $region44
      $region43: #{tpu_custom_call.1} parent=5 // pred_region
        %s245 = ssub.s32 %s19, 1
        %s246 = sand.u32 %s32, 1
        %s247 = scalar_lea.sflag [#allocation5], %s246
        %s248 = sand.u32 %s32, 1
        %s249 = smul.addr %s248, 16
        %s250 = scalar_lea.vmem [#allocation4], %s249
        // Predicated region
        $region45: #{tpu_custom_call.1} parent=43 // pred_check
          %p251 = pneg %p45
        $region46: #{tpu_custom_call.1} parent=43 // pred_check_branch
          %253 = sbr.rel (%p251) target = $region48
        $region47: #{tpu_custom_call.1} parent=43 // pred_region
          %255 = dma.done %s247, 256
        $region48: #{tpu_custom_call.1} parent=43 // pred_fallthru
          _
        // Predicated region
        $region49: #{tpu_custom_call.1} parent=43 // pred_check
          %p256 = pneg %p66
        $region50: #{tpu_custom_call.1} parent=43 // pred_check_branch
          %258 = sbr.rel (%p256) target = $region52
        $region51: #{tpu_custom_call.1} parent=43 // pred_region
          %260 = dma.done [#allocation8], 64
        $region52: #{tpu_custom_call.1} parent=43 // pred_fallthru
          _
        %s261 = sand.u32 %s32, 1
        %s262 = scalar_lea.sflag [#allocation5], %s261
        %s263 = sand.u32 %s32, 1
        %s264 = smul.addr %s263, 16
        %s265 = scalar_lea.vmem [#allocation4], %s264
        %p266 = pneg %p45
        %p267 = pneg %p42
        %p268 = pneg %p66
        %p269 = pneg %p63
        %p270 = pneg %p87
        %p271 = pneg %p84
        %p272 = pneg %p108
        %p273 = pneg %p105
        %p274 = pneg %p129
        %p275 = pneg %p126
        %p276 = pneg %p150
        %p277 = pneg %p147
        %p278 = pneg %p176
        %p279 = pneg %p173
        %s280 = sand.u32 %s163, 1
        %s281 = scalar_lea.sflag [#allocation6], %s280
        %s282 = sand.u32 %s163, 1
        %s283 = smul.addr %s282, 16
        %s284 = scalar_lea.vmem [#allocation9], %s283
        %285 = vst [vmem:[#allocation2] sm:$0xff] 0.0
        %vm286 = vcmask 138240
        %287 = vst.msk [vmem:[#allocation2 + $0x18] sm:$0xff] %vm286, 0.0
        %v288 = vld [vmem:[%s250] sm:$0xff]
        %v289 = vld [vmem:[%s250 + $0x8] sm:$0xff]
        %290 = vst [vmem:[#allocation2 + $0x8] sm:$0xff] %v288
        %291 = vst [vmem:[#allocation2 + $0x10] sm:$0xff] %v289
        %v292 = vld [vmem:[#allocation2] sm:$0xff]
        %v293 = vld [vmem:[#allocation2 + $0x8] sm:$0xff]
        %v294 = vld [vmem:[#allocation2 + $0x10] sm:$0xff]
        %v295 = vld [vmem:[#allocation7] ss:$2 sm:$0x3]
        %v297 = vperm.slane %v295, 0
        %v298 = vperm.slane %v295, 1
        %299 = vrot.lane.b32.xlu0 %v297, 111
        %v300 = vpop.permute.xlu0 %299
        %301 = vrot.lane.b32.xlu0 %v298, 111
        %v302 = vpop.permute.xlu0 %301
        %vm303 = vcmask 908288
        %v304 = vsel %vm303, %v300, %v302
        %v308 = vmul.f32 %v292, %v300
        %v309 = vmul.f32 %v293, %v304
        %v310 = vmul.f32 %v294, %v302
        %314 = vrot.lane.b32.xlu0 %v308, 17
        %v315 = vpop.permute.xlu0 %314
        %316 = vrot.lane.b32.xlu0 %v309, 17
        %v317 = vpop.permute.xlu0 %316
        %318 = vrot.lane.b32.xlu0 %v310, 17
        %v319 = vpop.permute.xlu0 %318
        %v320 = vsel %vm286, %v315, %v317
        %v321 = vsel %vm286, %v317, %v319
        %324 = vst [vmem:[#allocation3] sm:$0xff] %v320
        %325 = vst [vmem:[#allocation3 + $0x8] sm:$0xff] %v321
        %v326 = vld [vmem:[#allocation2] sm:$0xff]
        %v327 = vld [vmem:[#allocation2 + $0x8] sm:$0xff]
        %v328 = vld [vmem:[#allocation2 + $0x10] sm:$0xff]
        %332 = vrot.lane.b32.xlu0 %v326, 16
        %v333 = vpop.permute.xlu0 %332
        %334 = vrot.lane.b32.xlu0 %v327, 16
        %v335 = vpop.permute.xlu0 %334
        %336 = vrot.lane.b32.xlu0 %v328, 16
        %v337 = vpop.permute.xlu0 %336
        %vm338 = vcmask 130048
        %v339 = vsel %vm338, %v333, %v335
        %v340 = vsel %vm338, %v335, %v337
        %343 = vst [vmem:[#allocation3 + $0x10] sm:$0xff] %v339
        %344 = vst [vmem:[#allocation3 + $0x18] sm:$0xff] %v340
        %v345 = vld [vmem:[#allocation2] sm:$0xff]
        %v346 = vld [vmem:[#allocation2 + $0x8] sm:$0xff]
        %v347 = vld [vmem:[#allocation2 + $0x10] sm:$0xff]
        %s348 = scalar_lea.vmem [#allocation7], 1
        %v349 = vld [vmem:[%s348] ss:$2 sm:$0x3]
        %v351 = vperm.slane %v349, 0
        %v352 = vperm.slane %v349, 1
        %353 = vrot.lane.b32.xlu0 %v351, 113
        %v354 = vpop.permute.xlu0 %353
        %355 = vrot.lane.b32.xlu0 %v352, 113
        %v356 = vpop.permute.xlu0 %355
        %vm357 = vcmask 924672
        %v358 = vsel %vm357, %v354, %v356
        %v362 = vmul.f32 %v345, %v354
        %v363 = vmul.f32 %v346, %v358
        %v364 = vmul.f32 %v347, %v356
        %368 = vrot.lane.b32.xlu0 %v362, 15
        %v369 = vpop.permute.xlu0 %368
        %370 = vrot.lane.b32.xlu0 %v363, 15
        %v371 = vpop.permute.xlu0 %370
        %372 = vrot.lane.b32.xlu0 %v364, 15
        %v373 = vpop.permute.xlu0 %372
        %vm374 = vcmask 121856
        %v375 = vsel %vm374, %v369, %v371
        %v376 = vsel %vm374, %v371, %v373
        %379 = vst [vmem:[#allocation3 + $0x20] sm:$0xff] %v375
        %380 = vst [vmem:[#allocation3 + $0x28] sm:$0xff] %v376
        %v381 = vld [vmem:[#allocation2] sm:$0xff]
        %v382 = vld [vmem:[#allocation2 + $0x8] sm:$0xff]
        %v383 = vld [vmem:[#allocation2 + $0x10] sm:$0xff]
        %v384 = vld [vmem:[#allocation7] ss:$2 sm:$0x3]
        %v386 = vperm.slane %v384, 0
        %v387 = vperm.slane %v384, 1
        %388 = vrot.lane.b32.xlu0 %v386, 127
        %v389 = vpop.permute.xlu0 %388
        %390 = vrot.lane.b32.xlu0 %v387, 127
        %v391 = vpop.permute.xlu0 %390
        %vm392 = vcmask 1039360
        %v393 = vsel %vm392, %v389, %v391
        %v397 = vmul.f32 %v381, %v389
        %v398 = vmul.f32 %v382, %v393
        %v399 = vmul.f32 %v383, %v391
        %403 = vrot.lane.b32.xlu0 %v397, 1
        %v404 = vpop.permute.xlu0 %403
        %405 = vrot.lane.b32.xlu0 %v398, 1
        %v406 = vpop.permute.xlu0 %405
        %407 = vrot.lane.b32.xlu0 %v399, 1
        %v408 = vpop.permute.xlu0 %407
        %vm409 = vcmask 7168
        %v410 = vsel %vm409, %v404, %v406
        %v411 = vsel %vm409, %v406, %v408
        %414 = vst [vmem:[#allocation3 + $0x30] sm:$0xff] %v410
        %415 = vst [vmem:[#allocation3 + $0x38] sm:$0xff] %v411
        %v416 = vld [vmem:[#allocation2 + $0x8] sm:$0xff]
        %v417 = vld [vmem:[#allocation2 + $0x10] sm:$0xff]
        %418 = vst [vmem:[#allocation3 + $0x40] sm:$0xff] %v416
        %419 = vst [vmem:[#allocation3 + $0x48] sm:$0xff] %v417
        %v420 = vld [vmem:[#allocation2 + $0x8] sm:$0xff]
        %v421 = vld [vmem:[#allocation2 + $0x10] sm:$0xff]
        %v422 = vld [vmem:[#allocation2 + $0x18] sm:$0xff]
        %v423 = vld [vmem:[%s348] ss:$2 sm:$0x3]
        %v425 = vperm.slane %v423, 0
        %v426 = vperm.slane %v423, 1
        %427 = vrot.lane.b32.xlu0 %v425, 1
        %v428 = vpop.permute.xlu0 %427
        %429 = vrot.lane.b32.xlu0 %v426, 1
        %v430 = vpop.permute.xlu0 %429
        %v431 = vsel %vm409, %v428, %v430
        %v435 = vmul.f32 %v420, %v428
        %v436 = vmul.f32 %v421, %v431
        %v437 = vmul.f32 %v422, %v430
        %441 = vrot.lane.b32.xlu0 %v435, 127
        %v442 = vpop.permute.xlu0 %441
        %443 = vrot.lane.b32.xlu0 %v436, 127
        %v444 = vpop.permute.xlu0 %443
        %445 = vrot.lane.b32.xlu0 %v437, 127
        %v446 = vpop.permute.xlu0 %445
        %v447 = vsel %vm392, %v442, %v444
        %v448 = vsel %vm392, %v444, %v446
        %451 = vst [vmem:[#allocation3 + $0x50] sm:$0xff] %v447
        %452 = vst [vmem:[#allocation3 + $0x58] sm:$0xff] %v448
        %v453 = vld [vmem:[#allocation2 + $0x8] sm:$0xff]
        %v454 = vld [vmem:[#allocation2 + $0x10] sm:$0xff]
        %v455 = vld [vmem:[#allocation2 + $0x18] sm:$0xff]
        %v456 = vld [vmem:[#allocation7] ss:$2 sm:$0x3]
        %v458 = vperm.slane %v456, 0
        %v459 = vperm.slane %v456, 1
        %460 = vrot.lane.b32.xlu0 %v458, 15
        %v461 = vpop.permute.xlu0 %460
        %462 = vrot.lane.b32.xlu0 %v459, 15
        %v463 = vpop.permute.xlu0 %462
        %v464 = vsel %vm374, %v461, %v463
        %v468 = vmul.f32 %v453, %v461
        %v469 = vmul.f32 %v454, %v464
        %v470 = vmul.f32 %v455, %v463
        %474 = vrot.lane.b32.xlu0 %v468, 113
        %v475 = vpop.permute.xlu0 %474
        %476 = vrot.lane.b32.xlu0 %v469, 113
        %v477 = vpop.permute.xlu0 %476
        %478 = vrot.lane.b32.xlu0 %v470, 113
        %v479 = vpop.permute.xlu0 %478
        %v480 = vsel %vm357, %v475, %v477
        %v481 = vsel %vm357, %v477, %v479
        %484 = vst [vmem:[#allocation3 + $0x60] sm:$0xff] %v480
        %485 = vst [vmem:[#allocation3 + $0x68] sm:$0xff] %v481
        %v486 = vld [vmem:[#allocation2 + $0x8] sm:$0xff]
        %v487 = vld [vmem:[#allocation2 + $0x10] sm:$0xff]
        %v488 = vld [vmem:[#allocation2 + $0x18] sm:$0xff]
        %492 = vrot.lane.b32.xlu0 %v486, 112
        %v493 = vpop.permute.xlu0 %492
        %494 = vrot.lane.b32.xlu0 %v487, 112
        %v495 = vpop.permute.xlu0 %494
        %496 = vrot.lane.b32.xlu0 %v488, 112
        %v497 = vpop.permute.xlu0 %496
        %vm498 = vcmask 916480
        %v499 = vsel %vm498, %v493, %v495
        %v500 = vsel %vm498, %v495, %v497
        %503 = vst [vmem:[#allocation3 + $0x70] sm:$0xff] %v499
        %504 = vst [vmem:[#allocation3 + $0x78] sm:$0xff] %v500
        %v505 = vld [vmem:[#allocation2 + $0x8] sm:$0xff]
        %v506 = vld [vmem:[#allocation2 + $0x10] sm:$0xff]
        %v507 = vld [vmem:[#allocation2 + $0x18] sm:$0xff]
        %v508 = vld [vmem:[%s348] ss:$2 sm:$0x3]
        %v510 = vperm.slane %v508, 0
        %v511 = vperm.slane %v508, 1
        %512 = vrot.lane.b32.xlu0 %v510, 17
        %v513 = vpop.permute.xlu0 %512
        %514 = vrot.lane.b32.xlu0 %v511, 17
        %v515 = vpop.permute.xlu0 %514
        %v516 = vsel %vm286, %v513, %v515
        %v520 = vmul.f32 %v505, %v513
        %v521 = vmul.f32 %v506, %v516
        %v522 = vmul.f32 %v507, %v515
        %526 = vrot.lane.b32.xlu0 %v520, 111
        %v527 = vpop.permute.xlu0 %526
        %528 = vrot.lane.b32.xlu0 %v521, 111
        %v529 = vpop.permute.xlu0 %528
        %530 = vrot.lane.b32.xlu0 %v522, 111
        %v531 = vpop.permute.xlu0 %530
        %v532 = vsel %vm303, %v527, %v529
        %v533 = vsel %vm303, %v529, %v531
        %536 = vst [vmem:[#allocation3 + $0x80] sm:$0xff] %v532
        %537 = vst [vmem:[#allocation3 + $0x88] sm:$0xff] %v533
        %v538 = vld [vmem:[%s2] sm:$0xff]
        %v539 = vld [vmem:[#allocation3] sm:$0xff]
        %v540 = vld [vmem:[#allocation3 + $0x8] sm:$0xff]
        %v541 = vld [vmem:[#allocation3 + $0x10] sm:$0xff]
        %v542 = vld [vmem:[#allocation3 + $0x18] sm:$0xff]
        %v543 = vld [vmem:[#allocation3 + $0x20] sm:$0xff]
        %v544 = vld [vmem:[#allocation3 + $0x28] sm:$0xff]
        %v545 = vld [vmem:[#allocation3 + $0x30] sm:$0xff]
        %v546 = vld [vmem:[#allocation3 + $0x38] sm:$0xff]
        %v547 = vld [vmem:[#allocation3 + $0x40] sm:$0xff]
        %v548 = vld [vmem:[#allocation3 + $0x48] sm:$0xff]
        %v549 = vld [vmem:[#allocation3 + $0x50] sm:$0xff]
        %v550 = vld [vmem:[#allocation3 + $0x58] sm:$0xff]
        %v551 = vld [vmem:[#allocation3 + $0x60] sm:$0xff]
        %v552 = vld [vmem:[#allocation3 + $0x68] sm:$0xff]
        %v553 = vld [vmem:[#allocation3 + $0x70] sm:$0xff]
        %v554 = vld [vmem:[#allocation3 + $0x78] sm:$0xff]
        %v555 = vld [vmem:[#allocation3 + $0x80] sm:$0xff]
        %v556 = vld [vmem:[#allocation3 + $0x88] sm:$0xff]
        %v557 = vld [vmem:[%s3] sm:$0xff]
        %559 = vset.pattern.permute.xlu0 0
        %560 = vperm.xlu0 %559, %v557
        %v561 = vpop.permute.xlu0 %560
        %vm563 = vcmask 588800
        %v565 = vsel %vm563, %v538, 0
        %567 = vmatpush.msra.mxu0 0.0
        %568 = vmatpush.msra.mxu0 0.0
        %569 = vmatpush.msra.mxu0 0.0
        %570 = vmatpush.msra.mxu0 0.0
        %571 = vmatpush.msra.mxu0 0.0
        %572 = vmatpush.msra.mxu0 0.0
        %573 = vmatpush.msra.mxu0 0.0
        %574 = vmatpush.msra.mxu0 %v555
        %575 = vmatpush.msra.mxu0 %v553
        %576 = vmatpush.msra.mxu0 %v551
        %577 = vmatpush.msra.mxu0 %v549
        %578 = vmatpush.msra.mxu0 %v547
        %579 = vmatpush.msra.mxu0 %v545
        %580 = vmatpush.msra.mxu0 %v543
        %581 = vmatpush.msra.mxu0 %v541
        %582 = vmatpush.msra.mxu0 %v539
        %583 = vmatmul.f32.gmra.mxu0 %v565
        %v584 = vpop.f32.mrf.mxu0
        %v585 = vadd.f32 %v561, %v584
        %586 = vdwg.mxu0
        %587 = vmatpush.msra.mxu0 0.0
        %588 = vmatpush.msra.mxu0 0.0
        %589 = vmatpush.msra.mxu0 0.0
        %590 = vmatpush.msra.mxu0 0.0
        %591 = vmatpush.msra.mxu0 0.0
        %592 = vmatpush.msra.mxu0 0.0
        %593 = vmatpush.msra.mxu0 0.0
        %594 = vmatpush.msra.mxu0 %v556
        %595 = vmatpush.msra.mxu0 %v554
        %596 = vmatpush.msra.mxu0 %v552
        %597 = vmatpush.msra.mxu0 %v550
        %598 = vmatpush.msra.mxu0 %v548
        %599 = vmatpush.msra.mxu0 %v546
        %600 = vmatpush.msra.mxu0 %v544
        %601 = vmatpush.msra.mxu0 %v542
        %602 = vmatpush.msra.mxu0 %v540
        %603 = vmatmul.f32.gmra.mxu0 %v565
        %v604 = vpop.f32.mrf.mxu0
        %v605 = vadd.f32 %v561, %v604
        %606 = vdwg.mxu0
        %v607 = vmul.f32 %v585, 0.1
        %v608 = vmul.f32 %v605, 0.1
        %v609 = vmax.f32 %v585, %v607
        %v610 = vmax.f32 %v605, %v608
        %611 = vst [vmem:[#allocation2 + $0x8] sm:$0xff] %v609
        %612 = vst [vmem:[#allocation2 + $0x10] sm:$0xff] %v610
        %v613 = vld [vmem:[#allocation2] sm:$0xff]
        %v614 = vld [vmem:[#allocation2 + $0x8] sm:$0xff]
        %v615 = vld [vmem:[#allocation2 + $0x10] sm:$0xff]
        %v616 = vld [vmem:[#allocation7] ss:$2 sm:$0x3]
        %v618 = vperm.slane %v616, 0
        %v619 = vperm.slane %v616, 1
        %620 = vrot.lane.b32.xlu0 %v618, 111
        %v621 = vpop.permute.xlu0 %620
        %622 = vrot.lane.b32.xlu0 %v619, 111
        %v623 = vpop.permute.xlu0 %622
        %v624 = vsel %vm303, %v621, %v623
        %v628 = vmul.f32 %v613, %v621
        %v629 = vmul.f32 %v614, %v624
        %v630 = vmul.f32 %v615, %v623
        %634 = vrot.lane.b32.xlu0 %v628, 17
        %v635 = vpop.permute.xlu0 %634
        %636 = vrot.lane.b32.xlu0 %v629, 17
        %v637 = vpop.permute.xlu0 %636
        %638 = vrot.lane.b32.xlu0 %v630, 17
        %v639 = vpop.permute.xlu0 %638
        %v640 = vsel %vm286, %v635, %v637
        %v641 = vsel %vm286, %v637, %v639
        %644 = vst [vmem:[#allocation3] sm:$0xff] %v640
        %645 = vst [vmem:[#allocation3 + $0x8] sm:$0xff] %v641
        %v646 = vld [vmem:[#allocation2] sm:$0xff]
        %v647 = vld [vmem:[#allocation2 + $0x8] sm:$0xff]
        %v648 = vld [vmem:[#allocation2 + $0x10] sm:$0xff]
        %652 = vrot.lane.b32.xlu0 %v646, 16
        %v653 = vpop.permute.xlu0 %652
        %654 = vrot.lane.b32.xlu0 %v647, 16
        %v655 = vpop.permute.xlu0 %654
        %656 = vrot.lane.b32.xlu0 %v648, 16
        %v657 = vpop.permute.xlu0 %656
        %v658 = vsel %vm338, %v653, %v655
        %v659 = vsel %vm338, %v655, %v657
        %662 = vst [vmem:[#allocation3 + $0x10] sm:$0xff] %v658
        %663 = vst [vmem:[#allocation3 + $0x18] sm:$0xff] %v659
        %v664 = vld [vmem:[#allocation2] sm:$0xff]
        %v665 = vld [vmem:[#allocation2 + $0x8] sm:$0xff]
        %v666 = vld [vmem:[#allocation2 + $0x10] sm:$0xff]
        %v667 = vld [vmem:[%s348] ss:$2 sm:$0x3]
        %v669 = vperm.slane %v667, 0
        %v670 = vperm.slane %v667, 1
        %671 = vrot.lane.b32.xlu0 %v669, 113
        %v672 = vpop.permute.xlu0 %671
        %673 = vrot.lane.b32.xlu0 %v670, 113
        %v674 = vpop.permute.xlu0 %673
        %v675 = vsel %vm357, %v672, %v674
        %v679 = vmul.f32 %v664, %v672
        %v680 = vmul.f32 %v665, %v675
        %v681 = vmul.f32 %v666, %v674
        %685 = vrot.lane.b32.xlu0 %v679, 15
        %v686 = vpop.permute.xlu0 %685
        %687 = vrot.lane.b32.xlu0 %v680, 15
        %v688 = vpop.permute.xlu0 %687
        %689 = vrot.lane.b32.xlu0 %v681, 15
        %v690 = vpop.permute.xlu0 %689
        %v691 = vsel %vm374, %v686, %v688
        %v692 = vsel %vm374, %v688, %v690
        %695 = vst [vmem:[#allocation3 + $0x20] sm:$0xff] %v691
        %696 = vst [vmem:[#allocation3 + $0x28] sm:$0xff] %v692
        %v697 = vld [vmem:[#allocation2] sm:$0xff]
        %v698 = vld [vmem:[#allocation2 + $0x8] sm:$0xff]
        %v699 = vld [vmem:[#allocation2 + $0x10] sm:$0xff]
        %v700 = vld [vmem:[#allocation7] ss:$2 sm:$0x3]
        %v702 = vperm.slane %v700, 0
        %v703 = vperm.slane %v700, 1
        %704 = vrot.lane.b32.xlu0 %v702, 127
        %v705 = vpop.permute.xlu0 %704
        %706 = vrot.lane.b32.xlu0 %v703, 127
        %v707 = vpop.permute.xlu0 %706
        %v708 = vsel %vm392, %v705, %v707
        %v712 = vmul.f32 %v697, %v705
        %v713 = vmul.f32 %v698, %v708
        %v714 = vmul.f32 %v699, %v707
        %718 = vrot.lane.b32.xlu0 %v712, 1
        %v719 = vpop.permute.xlu0 %718
        %720 = vrot.lane.b32.xlu0 %v713, 1
        %v721 = vpop.permute.xlu0 %720
        %722 = vrot.lane.b32.xlu0 %v714, 1
        %v723 = vpop.permute.xlu0 %722
        %v724 = vsel %vm409, %v719, %v721
        %v725 = vsel %vm409, %v721, %v723
        %728 = vst [vmem:[#allocation3 + $0x30] sm:$0xff] %v724
        %729 = vst [vmem:[#allocation3 + $0x38] sm:$0xff] %v725
        %v730 = vld [vmem:[#allocation2 + $0x8] sm:$0xff]
        %v731 = vld [vmem:[#allocation2 + $0x10] sm:$0xff]
        %732 = vst [vmem:[#allocation3 + $0x40] sm:$0xff] %v730
        %733 = vst [vmem:[#allocation3 + $0x48] sm:$0xff] %v731
        %v734 = vld [vmem:[#allocation2 + $0x8] sm:$0xff]
        %v735 = vld [vmem:[#allocation2 + $0x10] sm:$0xff]
        %v736 = vld [vmem:[#allocation2 + $0x18] sm:$0xff]
        %v737 = vld [vmem:[%s348] ss:$2 sm:$0x3]
        %v739 = vperm.slane %v737, 0
        %v740 = vperm.slane %v737, 1
        %741 = vrot.lane.b32.xlu0 %v739, 1
        %v742 = vpop.permute.xlu0 %741
        %743 = vrot.lane.b32.xlu0 %v740, 1
        %v744 = vpop.permute.xlu0 %743
        %v745 = vsel %vm409, %v742, %v744
        %v749 = vmul.f32 %v734, %v742
        %v750 = vmul.f32 %v735, %v745
        %v751 = vmul.f32 %v736, %v744
        %755 = vrot.lane.b32.xlu0 %v749, 127
        %v756 = vpop.permute.xlu0 %755
        %757 = vrot.lane.b32.xlu0 %v750, 127
        %v758 = vpop.permute.xlu0 %757
        %759 = vrot.lane.b32.xlu0 %v751, 127
        %v760 = vpop.permute.xlu0 %759
        %v761 = vsel %vm392, %v756, %v758
        %v762 = vsel %vm392, %v758, %v760
        %765 = vst [vmem:[#allocation3 + $0x50] sm:$0xff] %v761
        %766 = vst [vmem:[#allocation3 + $0x58] sm:$0xff] %v762
        %v767 = vld [vmem:[#allocation2 + $0x8] sm:$0xff]
        %v768 = vld [vmem:[#allocation2 + $0x10] sm:$0xff]
        %v769 = vld [vmem:[#allocation2 + $0x18] sm:$0xff]
        %v770 = vld [vmem:[#allocation7] ss:$2 sm:$0x3]
        %v772 = vperm.slane %v770, 0
        %v773 = vperm.slane %v770, 1
        %774 = vrot.lane.b32.xlu0 %v772, 15
        %v775 = vpop.permute.xlu0 %774
        %776 = vrot.lane.b32.xlu0 %v773, 15
        %v777 = vpop.permute.xlu0 %776
        %v778 = vsel %vm374, %v775, %v777
        %v782 = vmul.f32 %v767, %v775
        %v783 = vmul.f32 %v768, %v778
        %v784 = vmul.f32 %v769, %v777
        %788 = vrot.lane.b32.xlu0 %v782, 113
        %v789 = vpop.permute.xlu0 %788
        %790 = vrot.lane.b32.xlu0 %v783, 113
        %v791 = vpop.permute.xlu0 %790
        %792 = vrot.lane.b32.xlu0 %v784, 113
        %v793 = vpop.permute.xlu0 %792
        %v794 = vsel %vm357, %v789, %v791
        %v795 = vsel %vm357, %v791, %v793
        %798 = vst [vmem:[#allocation3 + $0x60] sm:$0xff] %v794
        %799 = vst [vmem:[#allocation3 + $0x68] sm:$0xff] %v795
        %v800 = vld [vmem:[#allocation2 + $0x8] sm:$0xff]
        %v801 = vld [vmem:[#allocation2 + $0x10] sm:$0xff]
        %v802 = vld [vmem:[#allocation2 + $0x18] sm:$0xff]
        %806 = vrot.lane.b32.xlu0 %v800, 112
        %v807 = vpop.permute.xlu0 %806
        %808 = vrot.lane.b32.xlu0 %v801, 112
        %v809 = vpop.permute.xlu0 %808
        %810 = vrot.lane.b32.xlu0 %v802, 112
        %v811 = vpop.permute.xlu0 %810
        %v812 = vsel %vm498, %v807, %v809
        %v813 = vsel %vm498, %v809, %v811
        %816 = vst [vmem:[#allocation3 + $0x70] sm:$0xff] %v812
        %817 = vst [vmem:[#allocation3 + $0x78] sm:$0xff] %v813
        %v818 = vld [vmem:[#allocation2 + $0x8] sm:$0xff]
        %v819 = vld [vmem:[#allocation2 + $0x10] sm:$0xff]
        %v820 = vld [vmem:[#allocation2 + $0x18] sm:$0xff]
        %v821 = vld [vmem:[%s348] ss:$2 sm:$0x3]
        %v823 = vperm.slane %v821, 0
        %v824 = vperm.slane %v821, 1
        %825 = vrot.lane.b32.xlu0 %v823, 17
        %v826 = vpop.permute.xlu0 %825
        %827 = vrot.lane.b32.xlu0 %v824, 17
        %v828 = vpop.permute.xlu0 %827
        %v829 = vsel %vm286, %v826, %v828
        %v833 = vmul.f32 %v818, %v826
        %v834 = vmul.f32 %v819, %v829
        %v835 = vmul.f32 %v820, %v828
        %839 = vrot.lane.b32.xlu0 %v833, 111
        %v840 = vpop.permute.xlu0 %839
        %841 = vrot.lane.b32.xlu0 %v834, 111
        %v842 = vpop.permute.xlu0 %841
        %843 = vrot.lane.b32.xlu0 %v835, 111
        %v844 = vpop.permute.xlu0 %843
        %v845 = vsel %vm303, %v840, %v842
        %v846 = vsel %vm303, %v842, %v844
        %849 = vst [vmem:[#allocation3 + $0x80] sm:$0xff] %v845
        %850 = vst [vmem:[#allocation3 + $0x88] sm:$0xff] %v846
        %v851 = vld [vmem:[%s4] sm:$0xff]
        %v852 = vld [vmem:[#allocation3] sm:$0xff]
        %v853 = vld [vmem:[#allocation3 + $0x8] sm:$0xff]
        %v854 = vld [vmem:[#allocation3 + $0x10] sm:$0xff]
        %v855 = vld [vmem:[#allocation3 + $0x18] sm:$0xff]
        %v856 = vld [vmem:[#allocation3 + $0x20] sm:$0xff]
        %v857 = vld [vmem:[#allocation3 + $0x28] sm:$0xff]
        %v858 = vld [vmem:[#allocation3 + $0x30] sm:$0xff]
        %v859 = vld [vmem:[#allocation3 + $0x38] sm:$0xff]
        %v860 = vld [vmem:[#allocation3 + $0x40] sm:$0xff]
        %v861 = vld [vmem:[#allocation3 + $0x48] sm:$0xff]
        %v862 = vld [vmem:[#allocation3 + $0x50] sm:$0xff]
        %v863 = vld [vmem:[#allocation3 + $0x58] sm:$0xff]
        %v864 = vld [vmem:[#allocation3 + $0x60] sm:$0xff]
        %v865 = vld [vmem:[#allocation3 + $0x68] sm:$0xff]
        %v866 = vld [vmem:[#allocation3 + $0x70] sm:$0xff]
        %v867 = vld [vmem:[#allocation3 + $0x78] sm:$0xff]
        %v868 = vld [vmem:[#allocation3 + $0x80] sm:$0xff]
        %v869 = vld [vmem:[#allocation3 + $0x88] sm:$0xff]
        %v870 = vld [vmem:[%s5] sm:$0xff]
        %872 = vset.pattern.permute.xlu0 0
        %873 = vperm.xlu0 %872, %v870
        %v874 = vpop.permute.xlu0 %873
        %v877 = vsel %vm563, %v851, 0
        %879 = vmatpush.msra.mxu0 0.0
        %880 = vmatpush.msra.mxu0 0.0
        %881 = vmatpush.msra.mxu0 0.0
        %882 = vmatpush.msra.mxu0 0.0
        %883 = vmatpush.msra.mxu0 0.0
        %884 = vmatpush.msra.mxu0 0.0
        %885 = vmatpush.msra.mxu0 0.0
        %886 = vmatpush.msra.mxu0 %v868
        %887 = vmatpush.msra.mxu0 %v866
        %888 = vmatpush.msra.mxu0 %v864
        %889 = vmatpush.msra.mxu0 %v862
        %890 = vmatpush.msra.mxu0 %v860
        %891 = vmatpush.msra.mxu0 %v858
        %892 = vmatpush.msra.mxu0 %v856
        %893 = vmatpush.msra.mxu0 %v854
        %894 = vmatpush.msra.mxu0 %v852
        %895 = vmatmul.f32.gmra.mxu0 %v877
        %v896 = vpop.f32.mrf.mxu0
        %v897 = vadd.f32 %v874, %v896
        %898 = vdwg.mxu0
        %899 = vmatpush.msra.mxu0 0.0
        %900 = vmatpush.msra.mxu0 0.0
        %901 = vmatpush.msra.mxu0 0.0
        %902 = vmatpush.msra.mxu0 0.0
        %903 = vmatpush.msra.mxu0 0.0
        %904 = vmatpush.msra.mxu0 0.0
        %905 = vmatpush.msra.mxu0 0.0
        %906 = vmatpush.msra.mxu0 %v869
        %907 = vmatpush.msra.mxu0 %v867
        %908 = vmatpush.msra.mxu0 %v865
        %909 = vmatpush.msra.mxu0 %v863
        %910 = vmatpush.msra.mxu0 %v861
        %911 = vmatpush.msra.mxu0 %v859
        %912 = vmatpush.msra.mxu0 %v857
        %913 = vmatpush.msra.mxu0 %v855
        %914 = vmatpush.msra.mxu0 %v853
        %915 = vmatmul.f32.gmra.mxu0 %v877
        %v916 = vpop.f32.mrf.mxu0
        %v917 = vadd.f32 %v874, %v916
        %918 = vdwg.mxu0
        %v919 = vmul.f32 %v897, 0.1
        %v920 = vmul.f32 %v917, 0.1
        %v921 = vmax.f32 %v897, %v919
        %v922 = vmax.f32 %v917, %v920
        %v923 = vld [vmem:[%s250] sm:$0xff]
        %v924 = vld [vmem:[%s250 + $0x8] sm:$0xff]
        %v925 = vadd.f32 %v923, %v921
        %v926 = vadd.f32 %v924, %v922
        %927 = vst [vmem:[%s284] sm:$0xff] %v925
        %928 = vst [vmem:[%s284 + $0x8] sm:$0xff] %v926
        %s929 = sand.u32 %s163, 1
        %s930 = scalar_lea.sflag [#allocation6], %s929
        %s931 = sand.u32 %s163, 1
        %s932 = smul.addr %s931, 16
        %s933 = scalar_lea.vmem [#allocation9], %s932
        // Predicated region
        $region53: #{tpu_custom_call.1} parent=43 // pred_check
          %p934 = pneg %p173
        $region54: #{tpu_custom_call.1} parent=43 // pred_check_branch
          %936 = sbr.rel (%p934) target = $region56
        $region55: #{tpu_custom_call.1} parent=43 // pred_region
          %938 = vsyncadd %s930, 0
          %s939 = smul.addr %s24, 2
          %s940 = smul.addr %s939, 8
          %s941 = scalar_lea.hbm %s6, %s940
          %s943 = sshll.u32 %s933, 4
          %s944 = int_to_ptr.vmem [resolvable:$true] %s943
          %s945 = sshll.u32 %s941, 4
          %s946 = int_to_ptr.hbm [resolvable:$true] %s945
          %948 = dma.vmem_to_hbm [thread:$0]  %s944, 256, %s946, %s930
        $region56: #{tpu_custom_call.1} parent=43 // pred_fallthru
          _
      $region44: #{tpu_custom_call.1} parent=5 // pred_fallthru
        _
      %p949 = scmp.le.s32.totalorder 2, %s19
      // Predicated region
      $region57: #{tpu_custom_call.1} parent=5 // pred_check
        %p950 = pneg %p949
      $region58: #{tpu_custom_call.1} parent=5 // pred_check_branch
        %952 = sbr.rel (%p950) target = $region60
      $region59: #{tpu_custom_call.1} parent=5 // pred_region
        %s953 = ssub.s32 %s19, 2
        // Predicated region
        $region61: #{tpu_custom_call.1} parent=59 // pred_check
          %p954 = pneg %p179
        $region62: #{tpu_custom_call.1} parent=59 // pred_check_branch
          %956 = sbr.rel (%p954) target = $region64
        $region63: #{tpu_custom_call.1} parent=59 // pred_region
          %s957 = sand.u32 %s164, 1
          %s958 = scalar_lea.sflag [#allocation6], %s957
          %s959 = sand.u32 %s164, 1
          %s960 = smul.addr %s959, 16
          %s961 = scalar_lea.vmem [#allocation9], %s960
          %963 = dma.done %s958, 256
        $region64: #{tpu_custom_call.1} parent=59 // pred_fallthru
          _
      $region60: #{tpu_custom_call.1} parent=5 // pred_fallthru
        _
    $region6: #{tpu_custom_call.1} parent=1 // loop_footer
      %s23 = sadd.s32 1, %s19
    $region7: #{tpu_custom_call.1} parent=1 // loop_footer_branch
      %18 = sbr.rel target = $region3
    $region8: #{tpu_custom_call.1} parent=1 // loop_exit
      _
    %964 = vsyncpa [#allocation5], 1
    %s965 = scalar_lea.sflag [#allocation5], 1
    %966 = vsyncpa %s965, 1
    %967 = vsyncpa [#allocation8], 1
    %968 = vsyncpa [#allocation6], 1
    %s969 = scalar_lea.sflag [#allocation6], 1
    %970 = vsyncpa %s969, 1

</llo_original>
